<compile_context>
chip_gen: v5e
topology: v5e:2x2
jax: 0.10.0
libtpu: 0.0.40
codegen_flags: <defaults>
</compile_context>

<pallas_src>
import functools

import jax
import jax.numpy as jnp
from jax.experimental import pallas as pl
from jax.experimental.pallas import tpu as pltpu

# Scoped-VMEM budget: must stay under v7x's 64 MiB physical VMEM (plenty of
# headroom on v5e/v6e which have 128 MiB).
_VMEM_LIMIT = 48 * 1024 * 1024


# ------------------------- matmul + epilogue kernel -------------------------

def _mm_kernel_factory(relu: bool, has_residual: bool):
    """out = maybe_relu((A @ W) * scale + shift [+ residual]); fp32 epilogue."""
    def kernel(a_ref, w_ref, s_ref, t_ref, *rest):
        if has_residual:
            r_ref, o_ref = rest
        else:
            (o_ref,) = rest
        acc = jnp.dot(a_ref[...], w_ref[...], preferred_element_type=jnp.float32)
        acc = acc * s_ref[...] + t_ref[...]
        if has_residual:
            acc = acc + r_ref[...].astype(jnp.float32)
        if relu:
            acc = jnp.maximum(acc, 0.0)
        o_ref[...] = acc.astype(o_ref.dtype)
    return kernel


def matmul_scale_shift(a, w, scale, shift, *, relu=False, residual=None,
                       out_dtype=jnp.bfloat16):
    """Tiled (M, N) matmul with bf16 MXU operands and a fused BN epilogue."""
    M, K = a.shape
    K2, N = w.shape
    assert K == K2
    TM = 256 if M > 256 else M        # ragged tail blocks are masked by Pallas
    TN = 512 if N > 512 else N
    grid = (pl.cdiv(M, TM), pl.cdiv(N, TN))

    a = a.astype(jnp.bfloat16)
    w = w.astype(jnp.bfloat16)
    scale = scale.reshape(1, N).astype(jnp.float32)
    shift = shift.reshape(1, N).astype(jnp.float32)

    in_specs = [
        pl.BlockSpec((TM, K), lambda m, n: (m, 0)),   # A block resident over n
        pl.BlockSpec((K, TN), lambda m, n: (0, n)),   # W streamed over n
        pl.BlockSpec((1, TN), lambda m, n: (0, n)),
        pl.BlockSpec((1, TN), lambda m, n: (0, n)),
    ]
    args = [a, w, scale, shift]
    if residual is not None:
        in_specs.append(pl.BlockSpec((TM, TN), lambda m, n: (m, n)))
        args.append(residual.reshape(M, N).astype(jnp.bfloat16))

    kernel = _mm_kernel_factory(relu, residual is not None)
    return pl.pallas_call(
        kernel,
        out_shape=jax.ShapeDtypeStruct((M, N), out_dtype),
        grid=grid,
        in_specs=in_specs,
        out_specs=pl.BlockSpec((TM, TN), lambda m, n: (m, n)),
        compiler_params=pltpu.CompilerParams(
            dimension_semantics=("parallel", "parallel"),
            vmem_limit_bytes=_VMEM_LIMIT,
        ),
    )(*args)


# ---------------- fused stride-1 KxK conv + folded BN (+ReLU) ---------------

def _fused_conv_s1_kernel(xflat_ref, w_ref, s_ref, t_ref, o_ref, buf, sem, *,
                          kh, kw, cin, wp, th, wo, acc_rows, relu):
    n = pl.program_id(0)
    rt = pl.program_id(1)
    in_rows = th + kh - 1
    # One contiguous DMA: the output-row tile plus its (kh-1)-row halo,
    # full padded width, straight from HBM into VMEM scratch.
    cp = pltpu.make_async_copy(
        xflat_ref.at[n, pl.ds(rt * th * wp, in_rows * wp)], buf, sem)
    cp.start()
    cp.wait()
    acc = None
    for i in range(kh):
        for j in range(kw):
            tap = i * kw + j
            d = i * wp + j
            a_tap = buf[d:d + acc_rows, :]                  # [acc_rows, cin]
            w_tap = w_ref[tap * cin:(tap + 1) * cin, :]     # [cin, cout]
            part = jnp.dot(a_tap, w_tap, preferred_element_type=jnp.float32)
            acc = part if acc is None else acc + part
    acc = acc * s_ref[...] + t_ref[...]
    if relu:
        acc = jnp.maximum(acc, 0.0)
    res = acc.astype(o_ref.dtype)
    # Valid outputs live at flat rows t*wp + w (w < wo) of the accumulator.
    for t in range(th):
        o_ref[0, t, :, :] = res[t * wp:t * wp + wo, :]


def _pick_row_tile(ho):
    if ho <= 16:
        return ho
    for th in range(16, 0, -1):
        if ho % th == 0:
            return th
    return 1


def conv_bn_s1_fused(x, w, scale, shift, *, kh, kw, pad, relu):
    """Same-padding stride-1 conv + folded BN (+ReLU), NHWC, no im2col."""
    N, H, W, C = x.shape
    ho, wo = H, W
    wp = W + 2 * pad
    cout = w.shape[1]
    th = _pick_row_tile(ho)           # exact divisor of ho -> no ragged tiles
    n_rt = ho // th
    in_rows = th + kh - 1
    acc_rows = (th - 1) * wp + wo

    xp = jnp.pad(x.astype(jnp.bfloat16),
                 ((0, 0), (pad, pad), (pad, pad), (0, 0)))
    xflat = xp.reshape(N, (H + 2 * pad) * wp, C)

    kernel = functools.partial(_fused_conv_s1_kernel, kh=kh, kw=kw, cin=C,
                               wp=wp, th=th, wo=wo, acc_rows=acc_rows,
                               relu=relu)
    return pl.pallas_call(
        kernel,
        out_shape=jax.ShapeDtypeStruct((N, ho, wo, cout), jnp.bfloat16),
        grid=(N, n_rt),
        in_specs=[
            pl.BlockSpec(memory_space=pl.ANY),                      # HBM act
            pl.BlockSpec((kh * kw * C, cout), lambda n, r: (0, 0)),  # resident
            pl.BlockSpec((1, cout), lambda n, r: (0, 0)),
            pl.BlockSpec((1, cout), lambda n, r: (0, 0)),
        ],
        out_specs=pl.BlockSpec((1, th, wo, cout), lambda n, r: (n, r, 0, 0)),
        scratch_shapes=[pltpu.VMEM((in_rows * wp, C), jnp.bfloat16),
                        pltpu.SemaphoreType.DMA],
        compiler_params=pltpu.CompilerParams(
            dimension_semantics=("parallel", "parallel"),
            vmem_limit_bytes=_VMEM_LIMIT,
        ),
    )(xflat, w.astype(jnp.bfloat16),
      scale.reshape(1, cout).astype(jnp.float32),
      shift.reshape(1, cout).astype(jnp.float32))


# ------------------------------ pooling kernels -----------------------------

def _maxpool_kernel(x_ref, o_ref):
    o_ref[...] = jnp.max(x_ref[...], axis=0)


def maxpool_3x3_s2_p1(x):
    # TODO(synk): the 3x3 window gather is still materialized by XLA (9x copy
    # of the stem activation, bf16); only the reduction itself is a tiled
    # Pallas kernel.
    N, H, W, C = x.shape
    k, stride, pad = 3, 2, 1
    Ho = (H + 2 * pad - k) // stride + 1
    Wo = (W + 2 * pad - k) // stride + 1
    xp = jnp.pad(x, ((0, 0), (pad, pad), (pad, pad), (0, 0)),
                 constant_values=-jnp.inf)
    patches = [xp[:, i:i + stride * Ho:stride, j:j + stride * Wo:stride, :]
               for i in range(k) for j in range(k)]
    stacked = jnp.stack(patches, axis=0).reshape(k * k, N * Ho * Wo, C)
    M = N * Ho * Wo
    TM = 512 if M > 512 else M
    out = pl.pallas_call(
        _maxpool_kernel,
        out_shape=jax.ShapeDtypeStruct((M, C), x.dtype),
        grid=(pl.cdiv(M, TM),),
        in_specs=[pl.BlockSpec((k * k, TM, C), lambda m: (0, m, 0))],
        out_specs=pl.BlockSpec((TM, C), lambda m: (m, 0)),
        compiler_params=pltpu.CompilerParams(
            dimension_semantics=("parallel",),
            vmem_limit_bytes=_VMEM_LIMIT,
        ),
    )(stacked)
    return out.reshape(N, Ho, Wo, C)


def _avgpool_kernel(x_ref, o_ref):
    o_ref[...] = jnp.mean(x_ref[...].astype(jnp.float32), axis=1,
                          keepdims=True).astype(o_ref.dtype)


def global_avgpool(x):
    N, H, W, C = x.shape
    x2 = x.reshape(N, H * W, C)
    out = pl.pallas_call(
        _avgpool_kernel,
        out_shape=jax.ShapeDtypeStruct((N, 1, C), jnp.bfloat16),
        grid=(N,),
        in_specs=[pl.BlockSpec((1, H * W, C), lambda n: (n, 0, 0))],
        out_specs=pl.BlockSpec((1, 1, C), lambda n: (n, 0, 0)),
        compiler_params=pltpu.CompilerParams(
            dimension_semantics=("parallel",)),
    )(x2)
    return out.reshape(N, C)


# --------------------- conv wrappers (thin JAX glue only) -------------------

def _im2col(x, kh, kw, stride, pad):
    N, H, W, C = x.shape
    Ho = (H + 2 * pad - kh) // stride + 1
    Wo = (W + 2 * pad - kw) // stride + 1
    xp = jnp.pad(x, ((0, 0), (pad, pad), (pad, pad), (0, 0)))
    cols = [xp[:, i:i + stride * Ho:stride, j:j + stride * Wo:stride, :]
            for i in range(kh) for j in range(kw)]
    cols = jnp.concatenate(cols, axis=-1)              # [N, Ho, Wo, kh*kw*C]
    return cols.reshape(N * Ho * Wo, kh * kw * C), Ho, Wo


def conv_bn(x, w, scale, shift, *, kh, kw, stride, pad, relu, residual=None):
    """Conv2d(bias=False) + folded BatchNorm (+residual) (+ReLU); NHWC bf16."""
    N = x.shape[0]
    cout = w.shape[1]
    if kh == 1 and kw == 1:
        xs = x if stride == 1 else x[:, ::stride, ::stride, :]
        _, Ho, Wo, C = xs.shape
        out = matmul_scale_shift(xs.reshape(N * Ho * Wo, C), w, scale, shift,
                                 relu=relu, residual=residual)
        return out.reshape(N, Ho, Wo, cout)
    if (stride == 1 and residual is None
            and 2 * pad == kh - 1 and 2 * pad == kw - 1):
        try:
            return conv_bn_s1_fused(x, w, scale, shift, kh=kh, kw=kw, pad=pad,
                                    relu=relu)
        except Exception:
            # Conservative fallback if a lowering corner case is hit on an
            # older compiler: use the im2col path below (correct, just slower).
            pass
    # TODO(synk): strided spatial convs (7x7 stem, the three stride-2 3x3s)
    # still pay an XLA-side im2col materialization; they are bf16 and rare.
    cols, Ho, Wo = _im2col(x, kh, kw, stride, pad)
    out = matmul_scale_shift(cols, w, scale, shift, relu=relu,
                             residual=residual)
    return out.reshape(N, Ho, Wo, cout)


# ------------------------ deterministic parameter init ----------------------

class ParamGen:
    def __init__(self, seed=0):
        self._key = jax.random.PRNGKey(seed)

    def next_key(self):
        self._key, sub = jax.random.split(self._key)
        return sub

    def conv(self, kh, kw, cin, cout):
        # weight stored directly in tap-major im2col layout: [kh*kw*cin, cout]
        fan_in = kh * kw * cin
        std = (2.0 / fan_in) ** 0.5
        w = std * jax.random.normal(self.next_key(), (kh * kw * cin, cout),
                                    jnp.float32)
        return w.astype(jnp.bfloat16)

    def bn_folded(self, c, eps=1e-5):
        gamma = 1.0 + 0.02 * jax.random.normal(self.next_key(), (c,), jnp.float32)
        beta = 0.02 * jax.random.normal(self.next_key(), (c,), jnp.float32)
        mean = 0.02 * jax.random.normal(self.next_key(), (c,), jnp.float32)
        var = 1.0 + 0.1 * jax.random.uniform(self.next_key(), (c,), jnp.float32)
        scale = gamma / jnp.sqrt(var + eps)
        shift = beta - mean * scale
        return scale, shift

    def linear(self, cin, cout, std):
        w = std * jax.random.normal(self.next_key(), (cin, cout), jnp.float32)
        b = jnp.zeros((cout,), jnp.float32)
        return w, b


def build_params(class_num=10, bottleneck_dim=512, seed=0):
    g = ParamGen(seed)
    p = {'class_num': class_num}
    # stem
    p['conv1_w'] = g.conv(7, 7, 3, 64)
    p['conv1_s'], p['conv1_t'] = g.bn_folded(64)
    # Bottleneck layers: (planes, num_blocks, first_stride), expansion = 4
    layer_cfg = [(64, 3, 1), (128, 4, 2), (256, 6, 2), (512, 3, 2)]
    inplanes = 64
    layers = []
    for planes, nblocks, first_stride in layer_cfg:
        blocks = []
        for b in range(nblocks):
            stride = first_stride if b == 0 else 1
            bp = {'stride': stride}
            bp['w1'] = g.conv(1, 1, inplanes, planes)
            bp['s1'], bp['t1'] = g.bn_folded(planes)
            bp['w2'] = g.conv(3, 3, planes, planes)
            bp['s2'], bp['t2'] = g.bn_folded(planes)
            bp['w3'] = g.conv(1, 1, planes, planes * 4)
            bp['s3'], bp['t3'] = g.bn_folded(planes * 4)
            if stride != 1 or inplanes != planes * 4:
                bp['wd'] = g.conv(1, 1, inplanes, planes * 4)
                bp['sd'], bp['td'] = g.bn_folded(planes * 4)
            blocks.append(bp)
            inplanes = planes * 4
        layers.append(blocks)
    p['layers'] = layers

    # ClassBlock: Linear(2048->512) [kaiming fan_out, bias 0] + BatchNorm1d(512)
    # (weight ~ N(1, 0.02), bias 0, running stats 0/1) folded into scale/shift;
    # Dropout(0.5) is identity in eval; classifier Linear(512->class_num) with
    # std=0.001 weights and zero bias, zero-padded to a lane-dense 128-multiple
    # output (sliced back to class_num in the wrapper).
    w1, b1 = g.linear(inplanes, bottleneck_dim, std=(2.0 / bottleneck_dim) ** 0.5)
    gamma = 1.0 + 0.02 * jax.random.normal(g.next_key(), (bottleneck_dim,),
                                           jnp.float32)
    beta = jnp.zeros((bottleneck_dim,), jnp.float32)
    mean = jnp.zeros((bottleneck_dim,), jnp.float32)
    var = jnp.ones((bottleneck_dim,), jnp.float32)
    s = gamma / jnp.sqrt(var + 1e-5)
    p['fc1_w'] = w1.astype(jnp.bfloat16)
    p['fc1_s'] = s
    p['fc1_t'] = (b1 - mean) * s + beta
    w2, b2 = g.linear(bottleneck_dim, class_num, std=0.001)
    n_pad = ((class_num + 127) // 128) * 128
    p['fc2_w'] = (jnp.zeros((bottleneck_dim, n_pad), jnp.float32)
                  .at[:, :class_num].set(w2)).astype(jnp.bfloat16)
    p['fc2_b'] = jnp.zeros((n_pad,), jnp.float32).at[:class_num].set(b2)
    p['fc2_ones'] = jnp.ones((n_pad,), jnp.float32)
    return p


# --------------------------------- forward ----------------------------------

def bottleneck_forward(x, bp):
    stride = bp['stride']
    identity = x
    out = conv_bn(x, bp['w1'], bp['s1'], bp['t1'],
                  kh=1, kw=1, stride=1, pad=0, relu=True)
    out = conv_bn(out, bp['w2'], bp['s2'], bp['t2'],
                  kh=3, kw=3, stride=stride, pad=1, relu=True)
    if 'wd' in bp:
        identity = conv_bn(x, bp['wd'], bp['sd'], bp['td'],
                           kh=1, kw=1, stride=stride, pad=0, relu=False)
    # conv3 + bn3 + residual add + final ReLU fused into one Pallas call
    out = conv_bn(out, bp['w3'], bp['s3'], bp['t3'],
                  kh=1, kw=1, stride=1, pad=0, relu=True, residual=identity)
    return out


def resnet50_forward(x_nchw, p):
    # NCHW fp32 (PyTorch input convention) -> NHWC bf16 (kernel layout)
    x = jnp.transpose(x_nchw, (0, 2, 3, 1)).astype(jnp.bfloat16)
    # stem: conv1 -> bn1 -> relu -> maxpool
    x = conv_bn(x, p['conv1_w'], p['conv1_s'], p['conv1_t'],
                kh=7, kw=7, stride=2, pad=3, relu=True)
    x = maxpool_3x3_s2_p1(x)
    # layer1..layer4
    for blocks in p['layers']:
        for bp in blocks:
            x = bottleneck_forward(x, bp)
    # avgpool + flatten  (== x.view(N, C))
    feat = global_avgpool(x)                                   # [N, 2048]
    # ClassBlock embedding: Linear + BatchNorm1d (folded), Dropout = identity
    h = matmul_scale_shift(feat, p['fc1_w'], p['fc1_s'], p['fc1_t'], relu=False)
    # ClassBlock classifier: Linear(512 -> class_num), lane-padded then sliced
    logits = matmul_scale_shift(h, p['fc2_w'], p['fc2_ones'], p['fc2_b'],
                                relu=False, out_dtype=jnp.float32)
    return logits[:, :p['class_num']]


if __name__ == "__main__":
    class_num = 10
    params = build_params(class_num=class_num, bottleneck_dim=512, seed=0)
    x = jax.random.normal(jax.random.PRNGKey(0), (2, 3, 64, 64), jnp.float32)
    out = resnet50_forward(x, params)
    out = jax.block_until_ready(out)
    assert out.shape == (2, class_num), out.shape
    print("KERNEL_OK")
</pallas_src>

<mosaic_0001>
module attributes {stable_mosaic.version = 11 : i64} {
  func.func @kernel(%arg0: i32, %arg1: i32, %arg2: memref<256x147xbf16, #tpu.memory_space<vmem>>, %arg3: memref<147x64xbf16, #tpu.memory_space<vmem>>, %arg4: memref<1x64xf32, #tpu.memory_space<vmem>>, %arg5: memref<1x64xf32, #tpu.memory_space<vmem>>, %arg6: memref<256x64xbf16, #tpu.memory_space<vmem>>) attributes {dimension_semantics = [#tpu.dimension_semantics<parallel>, #tpu.dimension_semantics<parallel>], iteration_bounds = array<i64: 8, 1>, scalar_prefetch = 0 : i64, scratch_operands = 0 : i64, tpu.core_type = #tpu.core_type<tc>, window_params = [{transform_indices = @transform_0, window_bounds = array<i64: 256, 147>}, {transform_indices = @transform_1, window_bounds = array<i64: 147, 64>}, {transform_indices = @transform_2, window_bounds = array<i64: 1, 64>}, {transform_indices = @transform_3, window_bounds = array<i64: 1, 64>}, {transform_indices = @transform_4, window_bounds = array<i64: 256, 64>}]} {
    %c0 = arith.constant 0 : index
    %c0_0 = arith.constant 0 : index
    %0 = vector.load %arg2[%c0, %c0_0] : memref<256x147xbf16, #tpu.memory_space<vmem>>, vector<256x147xbf16>
    %c0_1 = arith.constant 0 : index
    %c0_2 = arith.constant 0 : index
    %1 = vector.load %arg3[%c0_1, %c0_2] : memref<147x64xbf16, #tpu.memory_space<vmem>>, vector<147x64xbf16>
    %cst = arith.constant dense<0.000000e+00> : vector<256x64xf32>
    %2 = tpu.matmul %0, %1, %cst {dimension_numbers = #tpu.dot_dimension_numbers<[1], [0], [0], [1], [0, 0, 1, 1], [], []>} : vector<256x147xbf16>, vector<147x64xbf16>, vector<256x64xf32> -> vector<256x64xf32>
    %c0_3 = arith.constant 0 : index
    %c0_4 = arith.constant 0 : index
    %3 = vector.load %arg4[%c0_3, %c0_4] : memref<1x64xf32, #tpu.memory_space<vmem>>, vector<1x64xf32>
    %4 = vector.broadcast %3 : vector<1x64xf32> to vector<256x64xf32>
    %5 = arith.mulf %2, %4 : vector<256x64xf32>
    %c0_5 = arith.constant 0 : index
    %c0_6 = arith.constant 0 : index
    %6 = vector.load %arg5[%c0_5, %c0_6] : memref<1x64xf32, #tpu.memory_space<vmem>>, vector<1x64xf32>
    %7 = vector.broadcast %6 : vector<1x64xf32> to vector<256x64xf32>
    %8 = arith.addf %5, %7 : vector<256x64xf32>
    %cst_7 = arith.constant 0.000000e+00 : f32
    %9 = vector.broadcast %cst_7 : f32 to vector<256x64xf32>
    %10 = arith.maximumf %8, %9 : vector<256x64xf32>
    %11 = arith.truncf %10 : vector<256x64xf32> to vector<256x64xbf16>
    %c0_8 = arith.constant 0 : index
    %c0_9 = arith.constant 0 : index
    %12 = vector.load %arg6[%c0_8, %c0_9] : memref<256x64xbf16, #tpu.memory_space<vmem>>, vector<256x64xbf16>
    tpu.vector_store %arg6[%c0_8, %c0_9], %11 {strides = array<i32>} : memref<256x64xbf16, #tpu.memory_space<vmem>>, vector<256x64xbf16>,
    return
  }
  func.func @transform_0(%arg0: i32, %arg1: i32) -> (i32, i32) {
    %c0_i32 = arith.constant 0 : i32
    %c0_i32_0 = arith.constant 0 : i32
    return %arg0, %c0_i32 : i32, i32
  }
  func.func @transform_1(%arg0: i32, %arg1: i32) -> (i32, i32) {
    %c0_i32 = arith.constant 0 : i32
    %c0_i32_0 = arith.constant 0 : i32
    return %c0_i32, %arg1 : i32, i32
  }
  func.func @transform_2(%arg0: i32, %arg1: i32) -> (i32, i32) {
    %c0_i32 = arith.constant 0 : i32
    %c0_i32_0 = arith.constant 0 : i32
    return %c0_i32, %arg1 : i32, i32
  }
  func.func @transform_3(%arg0: i32, %arg1: i32) -> (i32, i32) {
    %c0_i32 = arith.constant 0 : i32
    %c0_i32_0 = arith.constant 0 : i32
    return %c0_i32, %arg1 : i32, i32
  }
  func.func @transform_4(%arg0: i32, %arg1: i32) -> (i32, i32) {
    %c0_i32 = arith.constant 0 : i32
    return %arg0, %arg1 : i32, i32
  }
}

</mosaic_0001>

<llo_original>
// kernel: tpu_custom_call.1
$region0: #{tpu_custom_call.1}
  #allocation0 [shape = 'u32[]', space=smem, size = 0x4, offset = 0x4, fixed_abs, tag = 'smem constant byte address 0x4 - core index']
  #allocation1 [shape = 'u32[72,128]{1,0:T(1,128)}', space=vmem, size = 0x9000, scoped, tag = 'internal scratch']
  %s0 = inlined_call_operand.vmem [shape: bf16[2048,147], index: 0, kind: input, shape index: {}]
  %s1 = inlined_call_operand.vmem [shape: bf16[147,64], index: 1, kind: input, shape index: {}]
  %s2 = inlined_call_operand.vmem [shape: f32[1,64], index: 2, kind: input, shape index: {}]
  %s3 = inlined_call_operand.vmem [shape: f32[1,64], index: 3, kind: input, shape index: {}]
  %s4 = inlined_call_operand.vmem [shape: bf16[2048,64], index: 4, kind: output, shape index: {}]
  %s5 = sld [smem:[#allocation0]]
  $region49: #{tpu_custom_call.1} parent=0
    _
  %s7 = ssub.s32 1, %s5
  %s8 = scalar_select 0, %s7, %s5
  loop: start=0, step=1, limit=10
  $region2: #{tpu_custom_call.1} parent=0 // loop_pre_header
    _
  $region3: #{tpu_custom_call.1} parent=0 // loop_header
    %s10 = sphi 0, %s14
    %p11 = scmp.ge.s32.totalorder %s10, 10
    %s17 = sphi 0, %s29
    %s18 = sphi 0, %s25
    %s19 = sphi 0, %s17
    %s20 = sphi 0, %s18
    %s21 = sphi 0, %s19
    %s22 = sphi 0, %s20
    %s32 = sphi 0, %s34
    %s35 = sphi 0, %s32
    %s36 = sphi 0, %s35
    %s52 = sphi 0, %s36
    %s58 = sphi 0, %s60
    %s61 = sphi 0, %s58
    %s62 = sphi 0, %s61
    %s78 = sphi 0, %s62
    %s84 = sphi 0, %s86
    %s87 = sphi 0, %s84
    %s88 = sphi 0, %s87
    %s104 = sphi 0, %s88
    %s110 = sphi 0, %s112
    %s113 = sphi 0, %s110
    %s114 = sphi 0, %s113
    %s130 = sphi 0, %s114
    %s138 = sphi 0, %s140
    %s141 = sphi 0, %s138
    %s142 = sphi 0, %s141
    %s158 = sphi 0, %s142
  $region4: #{tpu_custom_call.1} parent=0 // loop_header_branch
    %13 = sbr.rel (%p11) target = $region8
  $region5: #{tpu_custom_call.1} parent=0 // loop_body
    %s15 = ssub.s32 %s10, 1
    %s16 = ssub.s32 %s10, 2
    %s23 = sadd.s32 1, %s18
    %p24 = scmp.ge.s32.totalorder %s23, 1
    %s25 = scalar_select %p24, 0, %s23
    %s26 = sadd.s32 1, %s17
    %s27 = scalar_select %p24, %s26, %s17
    %p28 = scmp.ge.s32.totalorder %s27, 8
    %s29 = scalar_select %p28, 0, %s27
    %s30 = ssub.s32 %s17, %s29
    %p31 = scmp.eq.s32.totalorder %s30, 0
    %s33 = sadd.s32 %s32, 1
    %s34 = scalar_select %p31, %s32, %s33
    %p37 = pneg %p31
    %p38 = scmp.eq.s32.totalorder %s10, 7
    %p39 = por %p37, %p38
    %p40 = scmp.ne.s32.totalorder %s32, %s35
    %p41 = scmp.eq.s32.totalorder %s10, 0
    %p42 = por %p40, %p41
    %p43 = scmp.ne.s32.totalorder %s32, %s35
    %p44 = scmp.eq.s32.totalorder %s15, 7
    %p45 = por %p43, %p44
    %p46 = scmp.ne.s32.totalorder %s35, %s36
    %p47 = scmp.eq.s32.totalorder %s15, 0
    %p48 = por %p46, %p47
    %p49 = scmp.ne.s32.totalorder %s35, %s36
    %p50 = scmp.eq.s32.totalorder %s16, 7
    %p51 = por %p49, %p50
    %p53 = scmp.ne.s32.totalorder %s36, %s52
    %p54 = scmp.eq.s32.totalorder %s16, 0
    %p55 = por %p53, %p54
    %s56 = ssub.s32 %s18, %s25
    %p57 = scmp.eq.s32.totalorder %s56, 0
    %s59 = sadd.s32 %s58, 1
    %s60 = scalar_select %p57, %s58, %s59
    %p63 = pneg %p57
    %p64 = scmp.eq.s32.totalorder %s10, 7
    %p65 = por %p63, %p64
    %p66 = scmp.ne.s32.totalorder %s58, %s61
    %p67 = scmp.eq.s32.totalorder %s10, 0
    %p68 = por %p66, %p67
    %p69 = scmp.ne.s32.totalorder %s58, %s61
    %p70 = scmp.eq.s32.totalorder %s15, 7
    %p71 = por %p69, %p70
    %p72 = scmp.ne.s32.totalorder %s61, %s62
    %p73 = scmp.eq.s32.totalorder %s15, 0
    %p74 = por %p72, %p73
    %p75 = scmp.ne.s32.totalorder %s61, %s62
    %p76 = scmp.eq.s32.totalorder %s16, 7
    %p77 = por %p75, %p76
    %p79 = scmp.ne.s32.totalorder %s62, %s78
    %p80 = scmp.eq.s32.totalorder %s16, 0
    %p81 = por %p79, %p80
    %s82 = ssub.s32 %s18, %s25
    %p83 = scmp.eq.s32.totalorder %s82, 0
    %s85 = sadd.s32 %s84, 1
    %s86 = scalar_select %p83, %s84, %s85
    %p89 = pneg %p83
    %p90 = scmp.eq.s32.totalorder %s10, 7
    %p91 = por %p89, %p90
    %p92 = scmp.ne.s32.totalorder %s84, %s87
    %p93 = scmp.eq.s32.totalorder %s10, 0
    %p94 = por %p92, %p93
    %p95 = scmp.ne.s32.totalorder %s84, %s87
    %p96 = scmp.eq.s32.totalorder %s15, 7
    %p97 = por %p95, %p96
    %p98 = scmp.ne.s32.totalorder %s87, %s88
    %p99 = scmp.eq.s32.totalorder %s15, 0
    %p100 = por %p98, %p99
    %p101 = scmp.ne.s32.totalorder %s87, %s88
    %p102 = scmp.eq.s32.totalorder %s16, 7
    %p103 = por %p101, %p102
    %p105 = scmp.ne.s32.totalorder %s88, %s104
    %p106 = scmp.eq.s32.totalorder %s16, 0
    %p107 = por %p105, %p106
    %s108 = ssub.s32 %s18, %s25
    %p109 = scmp.eq.s32.totalorder %s108, 0
    %s111 = sadd.s32 %s110, 1
    %s112 = scalar_select %p109, %s110, %s111
    %p115 = pneg %p109
    %p116 = scmp.eq.s32.totalorder %s10, 7
    %p117 = por %p115, %p116
    %p118 = scmp.ne.s32.totalorder %s110, %s113
    %p119 = scmp.eq.s32.totalorder %s10, 0
    %p120 = por %p118, %p119
    %p121 = scmp.ne.s32.totalorder %s110, %s113
    %p122 = scmp.eq.s32.totalorder %s15, 7
    %p123 = por %p121, %p122
    %p124 = scmp.ne.s32.totalorder %s113, %s114
    %p125 = scmp.eq.s32.totalorder %s15, 0
    %p126 = por %p124, %p125
    %p127 = scmp.ne.s32.totalorder %s113, %s114
    %p128 = scmp.eq.s32.totalorder %s16, 7
    %p129 = por %p127, %p128
    %p131 = scmp.ne.s32.totalorder %s114, %s130
    %p132 = scmp.eq.s32.totalorder %s16, 0
    %p133 = por %p131, %p132
    %s134 = ssub.s32 %s17, %s29
    %s135 = ssub.s32 %s18, %s25
    %s136 = sor.u32 %s134, %s135
    %p137 = scmp.eq.s32.totalorder %s136, 0
    %s139 = sadd.s32 %s138, 1
    %s140 = scalar_select %p137, %s138, %s139
    %p143 = pneg %p137
    %p144 = scmp.eq.s32.totalorder %s10, 7
    %p145 = por %p143, %p144
    %p146 = scmp.ne.s32.totalorder %s138, %s141
    %p147 = scmp.eq.s32.totalorder %s10, 0
    %p148 = por %p146, %p147
    %p149 = scmp.ne.s32.totalorder %s138, %s141
    %p150 = scmp.eq.s32.totalorder %s15, 7
    %p151 = por %p149, %p150
    %p152 = scmp.ne.s32.totalorder %s141, %s142
    %p153 = scmp.eq.s32.totalorder %s15, 0
    %p154 = por %p152, %p153
    %p155 = scmp.ne.s32.totalorder %s141, %s142
    %p156 = scmp.eq.s32.totalorder %s16, 7
    %p157 = por %p155, %p156
    %p159 = scmp.ne.s32.totalorder %s142, %s158
    %p160 = scmp.eq.s32.totalorder %s16, 0
    %p161 = por %p159, %p160
    %p162 = scmp.le.s32.totalorder 1, %s10
    %p163 = scmp.lt.s32.totalorder %s10, 9
    %p164 = pnand %p162, %p163
    %p165 = pneg %p164
    // Predicated region
    $region9: #{tpu_custom_call.1} parent=5 // pred_check
      _
    $region10: #{tpu_custom_call.1} parent=5 // pred_check_branch
      %167 = sbr.rel (%p164) target = $region12
    $region11: #{tpu_custom_call.1} parent=5 // pred_region
      %s168 = ssub.s32 %s10, 1
      // Predicated region
      $region13: #{tpu_custom_call.1} parent=11 // pred_check
        %p169 = pneg %p74
      $region14: #{tpu_custom_call.1} parent=11 // pred_check_branch
        %171 = sbr.rel (%p169) target = $region16
      $region15: #{tpu_custom_call.1} parent=11 // pred_region
        %p172 = scmp.lt.s32.totalorder %s20, 0
        %s173 = scalar_select %p172, %s20, 0
        %s174 = smul.addr %s173, 4
        %s175 = scalar_lea.vmem %s1, %s174
      $region16: #{tpu_custom_call.1} parent=11 // pred_fallthru
        _
      // Predicated region
      $region17: #{tpu_custom_call.1} parent=11 // pred_check
        %p176 = pneg %p100
      $region18: #{tpu_custom_call.1} parent=11 // pred_check_branch
        %178 = sbr.rel (%p176) target = $region20
      $region19: #{tpu_custom_call.1} parent=11 // pred_region
        %p179 = scmp.lt.s32.totalorder %s20, 0
        %s180 = scalar_select %p179, %s20, 0
        %s181 = scalar_lea.vmem %s2, %s180
      $region20: #{tpu_custom_call.1} parent=11 // pred_fallthru
        _
      // Predicated region
      $region21: #{tpu_custom_call.1} parent=11 // pred_check
        %p182 = pneg %p126
      $region22: #{tpu_custom_call.1} parent=11 // pred_check_branch
        %184 = sbr.rel (%p182) target = $region24
      $region23: #{tpu_custom_call.1} parent=11 // pred_region
        %p185 = scmp.lt.s32.totalorder %s20, 0
        %s186 = scalar_select %p185, %s20, 0
        %s187 = scalar_lea.vmem %s3, %s186
      $region24: #{tpu_custom_call.1} parent=11 // pred_fallthru
        _
    $region12: #{tpu_custom_call.1} parent=5 // pred_fallthru
      _
    %p188 = scmp.lt.s32.totalorder %s10, 8
    // Predicated region
    $region25: #{tpu_custom_call.1} parent=5 // pred_check
      %p189 = pneg %p188
    $region26: #{tpu_custom_call.1} parent=5 // pred_check_branch
      %191 = sbr.rel (%p189) target = $region28
    $region27: #{tpu_custom_call.1} parent=5 // pred_region
      // Predicated region
      $region29: #{tpu_custom_call.1} parent=27 // pred_check
        %p192 = pneg %p42
      $region30: #{tpu_custom_call.1} parent=27 // pred_check_branch
        %194 = sbr.rel (%p192) target = $region32
      $region31: #{tpu_custom_call.1} parent=27 // pred_region
        %s195 = smul.u32 32, %s17
        %p196 = scmp.lt.s32.totalorder %s195, 255
        %s197 = scalar_select %p196, %s195, 255
        %s198 = smul.addr %s197, 2
        %s199 = smul.addr %s198, 4
        %s200 = scalar_lea.vmem %s0, %s199
        %s201 = smul.u32 32, %s17
      $region32: #{tpu_custom_call.1} parent=27 // pred_fallthru
        _
    $region28: #{tpu_custom_call.1} parent=5 // pred_fallthru
      _
    %p202 = scmp.le.s32.totalorder 1, %s10
    %p203 = scmp.lt.s32.totalorder %s10, 9
    %p204 = pnand %p202, %p203
    %p205 = pneg %p204
    // Predicated region
    $region33: #{tpu_custom_call.1} parent=5 // pred_check
      _
    $region34: #{tpu_custom_call.1} parent=5 // pred_check_branch
      %207 = sbr.rel (%p204) target = $region36
    $region35: #{tpu_custom_call.1} parent=5 // pred_region
      %s208 = ssub.s32 %s10, 1
      %s209 = smul.u32 32, %s19
      %p210 = scmp.lt.s32.totalorder %s209, 255
      %s211 = scalar_select %p210, %s209, 255
      %s212 = smul.addr %s211, 2
      %s213 = smul.addr %s212, 4
      %s214 = scalar_lea.vmem %s0, %s213
      %p215 = pneg %p48
      %p216 = pneg %p45
      %p217 = scmp.lt.s32.totalorder %s20, 0
      %s218 = scalar_select %p217, %s20, 0
      %s219 = smul.addr %s218, 4
      %s220 = scalar_lea.vmem %s1, %s219
      %p221 = pneg %p74
      %p222 = pneg %p71
      %p223 = scmp.lt.s32.totalorder %s20, 0
      %s224 = scalar_select %p223, %s20, 0
      %s225 = scalar_lea.vmem %s2, %s224
      %p226 = pneg %p100
      %p227 = pneg %p97
      %p228 = scmp.lt.s32.totalorder %s20, 0
      %s229 = scalar_select %p228, %s20, 0
      %s230 = scalar_lea.vmem %s3, %s229
      %p231 = pneg %p126
      %p232 = pneg %p123
      %p233 = pneg %p154
      %p234 = pneg %p151
      %s235 = smul.u32 32, %s19
      %p236 = scmp.lt.s32.totalorder %s235, 255
      %s237 = scalar_select %p236, %s235, 255
      %p238 = scmp.lt.s32.totalorder %s20, 0
      %s239 = scalar_select %p238, %s20, 0
      %s240 = sadd.s32 %s239, %s237
      %s241 = smul.addr %s240, 4
      %s242 = scalar_lea.vmem %s4, %s241
      %s243 = smul.u32 32, %s19
      %p244 = scmp.lt.s32.totalorder %s243, 255
      %s245 = scalar_select %p244, %s243, 255
      %s246 = smul.addr %s245, 2
      %s247 = smul.addr %s246, 4
      %s248 = scalar_lea.vmem %s0, %s247
      %s249 = smul.u32 32, %s19
      %p250 = scmp.lt.s32.totalorder %s20, 0
      %s251 = scalar_select %p250, %s20, 0
      %s252 = smul.addr %s251, 4
      %s253 = scalar_lea.vmem %s1, %s252
      %p254 = scmp.lt.s32.totalorder %s20, 0
      %s255 = scalar_select %p254, %s20, 0
      %s256 = scalar_lea.vmem %s2, %s255
      %p257 = scmp.lt.s32.totalorder %s20, 0
      %s258 = scalar_select %p257, %s20, 0
      %s259 = scalar_lea.vmem %s3, %s258
      %s260 = smul.u32 32, %s19
      %p261 = scmp.lt.s32.totalorder %s260, 255
      %s262 = scalar_select %p261, %s260, 255
      %p263 = scmp.lt.s32.totalorder %s20, 0
      %s264 = scalar_select %p263, %s20, 0
      %s265 = sadd.s32 %s264, %s262
      %s266 = smul.addr %s265, 4
      %s267 = scalar_lea.vmem %s4, %s266
      %s268 = smul.u32 32, %s19
      %v270 = vld [vmem:[%s248] sm:$0xff]
      %v271 = vld [vmem:[%s248 + $0x8] sm:$0xff]
      %v272 = vld [vmem:[%s248 + $0x10] sm:$0xff]
      %v273 = vld [vmem:[%s248 + $0x18] sm:$0xff]
      %v274 = vld [vmem:[%s248 + $0x20] sm:$0xff]
      %v275 = vld [vmem:[%s248 + $0x28] sm:$0xff]
      %v276 = vld [vmem:[%s248 + $0x30] sm:$0xff]
      %v277 = vld [vmem:[%s248 + $0x38] sm:$0xff]
      %v278 = vld [vmem:[%s248 + $0x40] sm:$0xff]
      %v279 = vld [vmem:[%s248 + $0x48] sm:$0xff]
      %v280 = vld [vmem:[%s248 + $0x50] sm:$0xff]
      %v281 = vld [vmem:[%s248 + $0x58] sm:$0xff]
      %v282 = vld [vmem:[%s248 + $0x60] sm:$0xff]
      %v283 = vld [vmem:[%s248 + $0x68] sm:$0xff]
      %v284 = vld [vmem:[%s248 + $0x70] sm:$0xff]
      %v285 = vld [vmem:[%s248 + $0x78] sm:$0xff]
      %v286 = vld [vmem:[%s248 + $0x80] sm:$0xff]
      %v287 = vld [vmem:[%s248 + $0x88] sm:$0xff]
      %v288 = vld [vmem:[%s248 + $0x90] sm:$0xff]
      %v289 = vld [vmem:[%s248 + $0x98] sm:$0xff]
      %v290 = vld [vmem:[%s248 + $0xa0] sm:$0xff]
      %v291 = vld [vmem:[%s248 + $0xa8] sm:$0xff]
      %v292 = vld [vmem:[%s248 + $0xb0] sm:$0xff]
      %v293 = vld [vmem:[%s248 + $0xb8] sm:$0xff]
      %v294 = vld [vmem:[%s248 + $0xc0] sm:$0xff]
      %v295 = vld [vmem:[%s248 + $0xc8] sm:$0xff]
      %v296 = vld [vmem:[%s248 + $0xd0] sm:$0xff]
      %v297 = vld [vmem:[%s248 + $0xd8] sm:$0xff]
      %v298 = vld [vmem:[%s248 + $0xe0] sm:$0xff]
      %v299 = vld [vmem:[%s248 + $0xe8] sm:$0xff]
      %v300 = vld [vmem:[%s248 + $0xf0] sm:$0xff]
      %v301 = vld [vmem:[%s248 + $0xf8] sm:$0xff]
      %v302 = vld [vmem:[%s253] sm:$0xf]
      %v303 = vld [vmem:[%s253 + $0x4] sm:$0xf]
      %v304 = vld [vmem:[%s253 + $0x8] sm:$0xf]
      %v305 = vld [vmem:[%s253 + $0xc] sm:$0xf]
      %v306 = vld [vmem:[%s253 + $0x10] sm:$0xf]
      %v307 = vld [vmem:[%s253 + $0x14] sm:$0xf]
      %v308 = vld [vmem:[%s253 + $0x18] sm:$0xf]
      %v309 = vld [vmem:[%s253 + $0x1c] sm:$0xf]
      %v310 = vld [vmem:[%s253 + $0x20] sm:$0xf]
      %v311 = vld [vmem:[%s253 + $0x24] sm:$0xf]
      %v312 = vld [vmem:[%s253 + $0x28] sm:$0xf]
      %v313 = vld [vmem:[%s253 + $0x2c] sm:$0xf]
      %v314 = vld [vmem:[%s253 + $0x30] sm:$0xf]
      %v315 = vld [vmem:[%s253 + $0x34] sm:$0xf]
      %v316 = vld [vmem:[%s253 + $0x38] sm:$0xf]
      %v317 = vld [vmem:[%s253 + $0x3c] sm:$0xf]
      %v318 = vld [vmem:[%s253 + $0x40] sm:$0xf]
      %v319 = vld [vmem:[%s253 + $0x44] sm:$0xf]
      %v320 = vld [vmem:[%s253 + $0x48] sm:$0x3]
      %v353 = vunpack.c.l.b16 %v270
      %v354 = vunpack.c.h.b16 %v270
      %v355 = vunpack.c.l.b16 %v271
      %v356 = vunpack.c.h.b16 %v271
      %v357 = vunpack.c.l.b16 %v272
      %v358 = vunpack.c.h.b16 %v272
      %v359 = vunpack.c.l.b16 %v273
      %v360 = vunpack.c.h.b16 %v273
      %v361 = vunpack.c.l.b16 %v274
      %v362 = vunpack.c.h.b16 %v274
      %v363 = vunpack.c.l.b16 %v275
      %v364 = vunpack.c.h.b16 %v275
      %v365 = vunpack.c.l.b16 %v276
      %v366 = vunpack.c.h.b16 %v276
      %v367 = vunpack.c.l.b16 %v277
      %v368 = vunpack.c.h.b16 %v277
      %v369 = vunpack.c.l.b16 %v278
      %v370 = vunpack.c.h.b16 %v278
      %v371 = vunpack.c.l.b16 %v279
      %v372 = vunpack.c.h.b16 %v279
      %v373 = vunpack.c.l.b16 %v280
      %v374 = vunpack.c.h.b16 %v280
      %v375 = vunpack.c.l.b16 %v281
      %v376 = vunpack.c.h.b16 %v281
      %v377 = vunpack.c.l.b16 %v282
      %v378 = vunpack.c.h.b16 %v282
      %v379 = vunpack.c.l.b16 %v283
      %v380 = vunpack.c.h.b16 %v283
      %v381 = vunpack.c.l.b16 %v284
      %v382 = vunpack.c.h.b16 %v284
      %v383 = vunpack.c.l.b16 %v285
      %v384 = vunpack.c.h.b16 %v285
      %v385 = vunpack.c.l.b16 %v286
      %v386 = vunpack.c.h.b16 %v286
      %v387 = vunpack.c.l.b16 %v287
      %v388 = vunpack.c.h.b16 %v287
      %v389 = vunpack.c.l.b16 %v288
      %v390 = vunpack.c.h.b16 %v288
      %v391 = vunpack.c.l.b16 %v289
      %v392 = vunpack.c.h.b16 %v289
      %v393 = vunpack.c.l.b16 %v290
      %v394 = vunpack.c.h.b16 %v290
      %v395 = vunpack.c.l.b16 %v291
      %v396 = vunpack.c.h.b16 %v291
      %v397 = vunpack.c.l.b16 %v292
      %v398 = vunpack.c.h.b16 %v292
      %v399 = vunpack.c.l.b16 %v293
      %v400 = vunpack.c.h.b16 %v293
      %v401 = vunpack.c.l.b16 %v294
      %v402 = vunpack.c.h.b16 %v294
      %v403 = vunpack.c.l.b16 %v295
      %v404 = vunpack.c.h.b16 %v295
      %v405 = vunpack.c.l.b16 %v296
      %v406 = vunpack.c.h.b16 %v296
      %v407 = vunpack.c.l.b16 %v297
      %v408 = vunpack.c.h.b16 %v297
      %v409 = vunpack.c.l.b16 %v298
      %v410 = vunpack.c.h.b16 %v298
      %v411 = vunpack.c.l.b16 %v299
      %v412 = vunpack.c.h.b16 %v299
      %v413 = vunpack.c.l.b16 %v300
      %v414 = vunpack.c.h.b16 %v300
      %v415 = vunpack.c.l.b16 %v301
      %v416 = vunpack.c.h.b16 %v301
      %v417 = vpack.c.b16 %v355, %v353
      %v418 = vpack.c.b16 %v356, %v354
      %v419 = vpack.c.b16 %v359, %v357
      %v420 = vpack.c.b16 %v360, %v358
      %v421 = vpack.c.b16 %v363, %v361
      %v422 = vpack.c.b16 %v364, %v362
      %v423 = vpack.c.b16 %v367, %v365
      %v424 = vpack.c.b16 %v368, %v366
      %v425 = vpack.c.b16 %v371, %v369
      %v426 = vpack.c.b16 %v372, %v370
      %v427 = vpack.c.b16 %v375, %v373
      %v428 = vpack.c.b16 %v376, %v374
      %v429 = vpack.c.b16 %v379, %v377
      %v430 = vpack.c.b16 %v380, %v378
      %v431 = vpack.c.b16 %v383, %v381
      %v432 = vpack.c.b16 %v384, %v382
      %v433 = vpack.c.b16 %v387, %v385
      %v434 = vpack.c.b16 %v388, %v386
      %v435 = vpack.c.b16 %v391, %v389
      %v436 = vpack.c.b16 %v392, %v390
      %v437 = vpack.c.b16 %v395, %v393
      %v438 = vpack.c.b16 %v396, %v394
      %v439 = vpack.c.b16 %v399, %v397
      %v440 = vpack.c.b16 %v400, %v398
      %v441 = vpack.c.b16 %v403, %v401
      %v442 = vpack.c.b16 %v404, %v402
      %v443 = vpack.c.b16 %v407, %v405
      %v444 = vpack.c.b16 %v408, %v406
      %v445 = vpack.c.b16 %v411, %v409
      %v446 = vpack.c.b16 %v412, %v410
      %v447 = vpack.c.b16 %v415, %v413
      %v448 = vpack.c.b16 %v416, %v414
      %v484 = vunpack.c.l.b16 %v302
      %v485 = vunpack.c.l.b16 %v303
      %v486 = vunpack.c.l.b16 %v304
      %v487 = vunpack.c.l.b16 %v305
      %v488 = vunpack.c.l.b16 %v306
      %v489 = vunpack.c.l.b16 %v307
      %v490 = vunpack.c.l.b16 %v308
      %v491 = vunpack.c.l.b16 %v309
      %v492 = vunpack.c.l.b16 %v310
      %v493 = vunpack.c.l.b16 %v311
      %v494 = vunpack.c.l.b16 %v312
      %v495 = vunpack.c.l.b16 %v313
      %v496 = vunpack.c.l.b16 %v314
      %v497 = vunpack.c.l.b16 %v315
      %v498 = vunpack.c.l.b16 %v316
      %v499 = vunpack.c.l.b16 %v317
      %v500 = vunpack.c.l.b16 %v318
      %v501 = vunpack.c.l.b16 %v319
      %v502 = vunpack.c.l.b16 %v320
      %v503 = vpack.c.b16 %v485, %v484
      %v504 = vpack.c.b16 %v487, %v486
      %v505 = vpack.c.b16 %v489, %v488
      %v506 = vpack.c.b16 %v491, %v490
      %v507 = vpack.c.b16 %v493, %v492
      %v508 = vpack.c.b16 %v495, %v494
      %v509 = vpack.c.b16 %v497, %v496
      %v510 = vpack.c.b16 %v499, %v498
      %v511 = vpack.c.b16 %v501, %v500
      %v512 = vpack.c.b16 %v502, %v502
      %vm522 = vcmask 154624
      %v524 = vsel %vm522, %v418, 0
      %v527 = vsel %vm522, %v420, 0
      %v530 = vsel %vm522, %v422, 0
      %v533 = vsel %vm522, %v424, 0
      %v536 = vsel %vm522, %v426, 0
      %v539 = vsel %vm522, %v428, 0
      %v542 = vsel %vm522, %v430, 0
      %v545 = vsel %vm522, %v432, 0
      %v548 = vsel %vm522, %v434, 0
      %v551 = vsel %vm522, %v436, 0
      %v554 = vsel %vm522, %v438, 0
      %v557 = vsel %vm522, %v440, 0
      %v560 = vsel %vm522, %v442, 0
      %v563 = vsel %vm522, %v444, 0
      %v566 = vsel %vm522, %v446, 0
      %v569 = vsel %vm522, %v448, 0
      %vm571 = vcmask 1040384
      %vm572 = vcmask 1041408
      %v573 = vsel %vm571, 4294967295, 65535
      %v574 = vsel %vm572, %v573, 0
      %v576 = vand.u32 %v512, %v574
      %578 = vmatpush.bf16.msra.mxu0 %v510
      %579 = vmatpush.bf16.msra.mxu0 %v509
      %580 = vmatpush.bf16.msra.mxu0 %v508
      %581 = vmatpush.bf16.msra.mxu0 %v507
      %582 = vmatpush.bf16.msra.mxu0 %v506
      %583 = vmatpush.bf16.msra.mxu0 %v505
      %584 = vmatpush.bf16.msra.mxu0 %v504
      %585 = vmatpush.bf16.msra.mxu0 %v503
      %586 = vmatmul.bf16.gmra.mxu0 %v417
      %v587 = vpop.f32.mrf.mxu0
      %v588 = vadd.f32 0.0, %v587
      %v589 = vpop.f32.mrf.mxu0
      %v590 = vadd.f32 0.0, %v589
      %591 = vmatmul.bf16.gmra.mxu0 %v419
      %v592 = vpop.f32.mrf.mxu0
      %v593 = vadd.f32 0.0, %v592
      %v594 = vpop.f32.mrf.mxu0
      %v595 = vadd.f32 0.0, %v594
      %596 = vmatmul.bf16.gmra.mxu0 %v421
      %v597 = vpop.f32.mrf.mxu0
      %v598 = vadd.f32 0.0, %v597
      %v599 = vpop.f32.mrf.mxu0
      %v600 = vadd.f32 0.0, %v599
      %601 = vmatmul.bf16.gmra.mxu0 %v423
      %v602 = vpop.f32.mrf.mxu0
      %v603 = vadd.f32 0.0, %v602
      %v604 = vpop.f32.mrf.mxu0
      %v605 = vadd.f32 0.0, %v604
      %606 = vmatmul.bf16.gmra.mxu0 %v425
      %v607 = vpop.f32.mrf.mxu0
      %v608 = vadd.f32 0.0, %v607
      %v609 = vpop.f32.mrf.mxu0
      %v610 = vadd.f32 0.0, %v609
      %611 = vmatmul.bf16.gmra.mxu0 %v427
      %v612 = vpop.f32.mrf.mxu0
      %v613 = vadd.f32 0.0, %v612
      %v614 = vpop.f32.mrf.mxu0
      %v615 = vadd.f32 0.0, %v614
      %616 = vmatmul.bf16.gmra.mxu0 %v429
      %v617 = vpop.f32.mrf.mxu0
      %v618 = vadd.f32 0.0, %v617
      %v619 = vpop.f32.mrf.mxu0
      %v620 = vadd.f32 0.0, %v619
      %621 = vmatmul.bf16.gmra.mxu0 %v431
      %v622 = vpop.f32.mrf.mxu0
      %v623 = vadd.f32 0.0, %v622
      %v624 = vpop.f32.mrf.mxu0
      %v625 = vadd.f32 0.0, %v624
      %626 = vmatmul.bf16.gmra.mxu0 %v433
      %v627 = vpop.f32.mrf.mxu0
      %v628 = vadd.f32 0.0, %v627
      %v629 = vpop.f32.mrf.mxu0
      %v630 = vadd.f32 0.0, %v629
      %631 = vmatmul.bf16.gmra.mxu0 %v435
      %v632 = vpop.f32.mrf.mxu0
      %v633 = vadd.f32 0.0, %v632
      %v634 = vpop.f32.mrf.mxu0
      %v635 = vadd.f32 0.0, %v634
      %636 = vmatmul.bf16.gmra.mxu0 %v437
      %v637 = vpop.f32.mrf.mxu0
      %v638 = vadd.f32 0.0, %v637
      %v639 = vpop.f32.mrf.mxu0
      %v640 = vadd.f32 0.0, %v639
      %641 = vmatmul.bf16.gmra.mxu0 %v439
      %v642 = vpop.f32.mrf.mxu0
      %v643 = vadd.f32 0.0, %v642
      %v644 = vpop.f32.mrf.mxu0
      %v645 = vadd.f32 0.0, %v644
      %646 = vmatmul.bf16.gmra.mxu0 %v441
      %v647 = vpop.f32.mrf.mxu0
      %v648 = vadd.f32 0.0, %v647
      %v649 = vpop.f32.mrf.mxu0
      %v650 = vadd.f32 0.0, %v649
      %651 = vmatmul.bf16.gmra.mxu0 %v443
      %v652 = vpop.f32.mrf.mxu0
      %v653 = vadd.f32 0.0, %v652
      %v654 = vpop.f32.mrf.mxu0
      %v655 = vadd.f32 0.0, %v654
      %656 = vmatmul.bf16.gmra.mxu0 %v445
      %v657 = vpop.f32.mrf.mxu0
      %v658 = vadd.f32 0.0, %v657
      %v659 = vpop.f32.mrf.mxu0
      %v660 = vadd.f32 0.0, %v659
      %661 = vmatmul.bf16.gmra.mxu0 %v447
      %v662 = vpop.f32.mrf.mxu0
      %v663 = vadd.f32 0.0, %v662
      %v664 = vpop.f32.mrf.mxu0
      %v665 = vadd.f32 0.0, %v664
      %666 = vdwg.mxu0
      %667 = vmatpush.bf16.msra.mxu0 0
      %668 = vmatpush.bf16.msra.mxu0 0
      %669 = vmatpush.bf16.msra.mxu0 0
      %670 = vmatpush.bf16.msra.mxu0 0
      %671 = vmatpush.bf16.msra.mxu0 0
      %672 = vmatpush.bf16.msra.mxu0 0
      %673 = vmatpush.bf16.msra.mxu0 %v576
      %674 = vmatpush.bf16.msra.mxu0 %v511
      %675 = vmatmul.bf16.gmra.mxu0 %v524
      %v676 = vpop.f32.mrf.mxu0
      %v677 = vadd.f32 %v588, %v676
      %v678 = vpop.f32.mrf.mxu0
      %v679 = vadd.f32 %v590, %v678
      %680 = vmatmul.bf16.gmra.mxu0 %v527
      %v681 = vpop.f32.mrf.mxu0
      %v682 = vadd.f32 %v593, %v681
      %v683 = vpop.f32.mrf.mxu0
      %v684 = vadd.f32 %v595, %v683
      %685 = vmatmul.bf16.gmra.mxu0 %v530
      %v686 = vpop.f32.mrf.mxu0
      %v687 = vadd.f32 %v598, %v686
      %v688 = vpop.f32.mrf.mxu0
      %v689 = vadd.f32 %v600, %v688
      %690 = vmatmul.bf16.gmra.mxu0 %v533
      %v691 = vpop.f32.mrf.mxu0
      %v692 = vadd.f32 %v603, %v691
      %v693 = vpop.f32.mrf.mxu0
      %v694 = vadd.f32 %v605, %v693
      %695 = vmatmul.bf16.gmra.mxu0 %v536
      %v696 = vpop.f32.mrf.mxu0
      %v697 = vadd.f32 %v608, %v696
      %v698 = vpop.f32.mrf.mxu0
      %v699 = vadd.f32 %v610, %v698
      %700 = vmatmul.bf16.gmra.mxu0 %v539
      %v701 = vpop.f32.mrf.mxu0
      %v702 = vadd.f32 %v613, %v701
      %v703 = vpop.f32.mrf.mxu0
      %v704 = vadd.f32 %v615, %v703
      %705 = vmatmul.bf16.gmra.mxu0 %v542
      %v706 = vpop.f32.mrf.mxu0
      %v707 = vadd.f32 %v618, %v706
      %v708 = vpop.f32.mrf.mxu0
      %v709 = vadd.f32 %v620, %v708
      %710 = vmatmul.bf16.gmra.mxu0 %v545
      %v711 = vpop.f32.mrf.mxu0
      %v712 = vadd.f32 %v623, %v711
      %v713 = vpop.f32.mrf.mxu0
      %v714 = vadd.f32 %v625, %v713
      %715 = vmatmul.bf16.gmra.mxu0 %v548
      %v716 = vpop.f32.mrf.mxu0
      %v717 = vadd.f32 %v628, %v716
      %v718 = vpop.f32.mrf.mxu0
      %v719 = vadd.f32 %v630, %v718
      %720 = vmatmul.bf16.gmra.mxu0 %v551
      %v721 = vpop.f32.mrf.mxu0
      %v722 = vadd.f32 %v633, %v721
      %v723 = vpop.f32.mrf.mxu0
      %v724 = vadd.f32 %v635, %v723
      %725 = vmatmul.bf16.gmra.mxu0 %v554
      %v726 = vpop.f32.mrf.mxu0
      %v727 = vadd.f32 %v638, %v726
      %v728 = vpop.f32.mrf.mxu0
      %v729 = vadd.f32 %v640, %v728
      %730 = vmatmul.bf16.gmra.mxu0 %v557
      %v731 = vpop.f32.mrf.mxu0
      %v732 = vadd.f32 %v643, %v731
      %v733 = vpop.f32.mrf.mxu0
      %v734 = vadd.f32 %v645, %v733
      %735 = vmatmul.bf16.gmra.mxu0 %v560
      %v736 = vpop.f32.mrf.mxu0
      %v737 = vadd.f32 %v648, %v736
      %v738 = vpop.f32.mrf.mxu0
      %v739 = vadd.f32 %v650, %v738
      %740 = vmatmul.bf16.gmra.mxu0 %v563
      %v741 = vpop.f32.mrf.mxu0
      %v742 = vadd.f32 %v653, %v741
      %v743 = vpop.f32.mrf.mxu0
      %v744 = vadd.f32 %v655, %v743
      %745 = vmatmul.bf16.gmra.mxu0 %v566
      %v746 = vpop.f32.mrf.mxu0
      %v747 = vadd.f32 %v658, %v746
      %v748 = vpop.f32.mrf.mxu0
      %v749 = vadd.f32 %v660, %v748
      %750 = vmatmul.bf16.gmra.mxu0 %v569
      %v751 = vpop.f32.mrf.mxu0
      %v752 = vadd.f32 %v663, %v751
      %v753 = vpop.f32.mrf.mxu0
      %v754 = vadd.f32 %v665, %v753
      %755 = vdwg.mxu0
      %v756 = vld [vmem:[%s256] sm:$0x1]
      %v758 = vperm.slane %v756, 0
      %v760 = vmul.f32 %v677, %v758
      %v761 = vmul.f32 %v679, %v758
      %v762 = vmul.f32 %v682, %v758
      %v763 = vmul.f32 %v684, %v758
      %v764 = vmul.f32 %v687, %v758
      %v765 = vmul.f32 %v689, %v758
      %v766 = vmul.f32 %v692, %v758
      %v767 = vmul.f32 %v694, %v758
      %v768 = vmul.f32 %v697, %v758
      %v769 = vmul.f32 %v699, %v758
      %v770 = vmul.f32 %v702, %v758
      %v771 = vmul.f32 %v704, %v758
      %v772 = vmul.f32 %v707, %v758
      %v773 = vmul.f32 %v709, %v758
      %v774 = vmul.f32 %v712, %v758
      %v775 = vmul.f32 %v714, %v758
      %v776 = vmul.f32 %v717, %v758
      %v777 = vmul.f32 %v719, %v758
      %v778 = vmul.f32 %v722, %v758
      %v779 = vmul.f32 %v724, %v758
      %v780 = vmul.f32 %v727, %v758
      %v781 = vmul.f32 %v729, %v758
      %v782 = vmul.f32 %v732, %v758
      %v783 = vmul.f32 %v734, %v758
      %v784 = vmul.f32 %v737, %v758
      %v785 = vmul.f32 %v739, %v758
      %v786 = vmul.f32 %v742, %v758
      %v787 = vmul.f32 %v744, %v758
      %v788 = vmul.f32 %v747, %v758
      %v789 = vmul.f32 %v749, %v758
      %v790 = vmul.f32 %v752, %v758
      %v791 = vmul.f32 %v754, %v758
      %v792 = vld [vmem:[%s259] sm:$0x1]
      %v794 = vperm.slane %v792, 0
      %v796 = vadd.f32 %v760, %v794
      %v797 = vadd.f32 %v761, %v794
      %v798 = vadd.f32 %v762, %v794
      %v799 = vadd.f32 %v763, %v794
      %v800 = vadd.f32 %v764, %v794
      %v801 = vadd.f32 %v765, %v794
      %v802 = vadd.f32 %v766, %v794
      %v803 = vadd.f32 %v767, %v794
      %v804 = vadd.f32 %v768, %v794
      %v805 = vadd.f32 %v769, %v794
      %v806 = vadd.f32 %v770, %v794
      %v807 = vadd.f32 %v771, %v794
      %v808 = vadd.f32 %v772, %v794
      %v809 = vadd.f32 %v773, %v794
      %v810 = vadd.f32 %v774, %v794
      %v811 = vadd.f32 %v775, %v794
      %v812 = vadd.f32 %v776, %v794
      %v813 = vadd.f32 %v777, %v794
      %v814 = vadd.f32 %v778, %v794
      %v815 = vadd.f32 %v779, %v794
      %v816 = vadd.f32 %v780, %v794
      %v817 = vadd.f32 %v781, %v794
      %v818 = vadd.f32 %v782, %v794
      %v819 = vadd.f32 %v783, %v794
      %v820 = vadd.f32 %v784, %v794
      %v821 = vadd.f32 %v785, %v794
      %v822 = vadd.f32 %v786, %v794
      %v823 = vadd.f32 %v787, %v794
      %v824 = vadd.f32 %v788, %v794
      %v825 = vadd.f32 %v789, %v794
      %v826 = vadd.f32 %v790, %v794
      %v827 = vadd.f32 %v791, %v794
      %v828 = vmax.f32 %v796, 0.0
      %v829 = vmax.f32 %v797, 0.0
      %v830 = vmax.f32 %v798, 0.0
      %v831 = vmax.f32 %v799, 0.0
      %v832 = vmax.f32 %v800, 0.0
      %v833 = vmax.f32 %v801, 0.0
      %v834 = vmax.f32 %v802, 0.0
      %v835 = vmax.f32 %v803, 0.0
      %v836 = vmax.f32 %v804, 0.0
      %v837 = vmax.f32 %v805, 0.0
      %v838 = vmax.f32 %v806, 0.0
      %v839 = vmax.f32 %v807, 0.0
      %v840 = vmax.f32 %v808, 0.0
      %v841 = vmax.f32 %v809, 0.0
      %v842 = vmax.f32 %v810, 0.0
      %v843 = vmax.f32 %v811, 0.0
      %v844 = vmax.f32 %v812, 0.0
      %v845 = vmax.f32 %v813, 0.0
      %v846 = vmax.f32 %v814, 0.0
      %v847 = vmax.f32 %v815, 0.0
      %v848 = vmax.f32 %v816, 0.0
      %v849 = vmax.f32 %v817, 0.0
      %v850 = vmax.f32 %v818, 0.0
      %v851 = vmax.f32 %v819, 0.0
      %v852 = vmax.f32 %v820, 0.0
      %v853 = vmax.f32 %v821, 0.0
      %v854 = vmax.f32 %v822, 0.0
      %v855 = vmax.f32 %v823, 0.0
      %v856 = vmax.f32 %v824, 0.0
      %v857 = vmax.f32 %v825, 0.0
      %v858 = vmax.f32 %v826, 0.0
      %v859 = vmax.f32 %v827, 0.0
      %v860 = vpack.c.bf16 %v828, %v828
      %v861 = vpack.c.bf16 %v829, %v829
      %v862 = vpack.c.bf16 %v830, %v830
      %v863 = vpack.c.bf16 %v831, %v831
      %v864 = vpack.c.bf16 %v832, %v832
      %v865 = vpack.c.bf16 %v833, %v833
      %v866 = vpack.c.bf16 %v834, %v834
      %v867 = vpack.c.bf16 %v835, %v835
      %v868 = vpack.c.bf16 %v836, %v836
      %v869 = vpack.c.bf16 %v837, %v837
      %v870 = vpack.c.bf16 %v838, %v838
      %v871 = vpack.c.bf16 %v839, %v839
      %v872 = vpack.c.bf16 %v840, %v840
      %v873 = vpack.c.bf16 %v841, %v841
      %v874 = vpack.c.bf16 %v842, %v842
      %v875 = vpack.c.bf16 %v843, %v843
      %v876 = vpack.c.bf16 %v844, %v844
      %v877 = vpack.c.bf16 %v845, %v845
      %v878 = vpack.c.bf16 %v846, %v846
      %v879 = vpack.c.bf16 %v847, %v847
      %v880 = vpack.c.bf16 %v848, %v848
      %v881 = vpack.c.bf16 %v849, %v849
      %v882 = vpack.c.bf16 %v850, %v850
      %v883 = vpack.c.bf16 %v851, %v851
      %v884 = vpack.c.bf16 %v852, %v852
      %v885 = vpack.c.bf16 %v853, %v853
      %v886 = vpack.c.bf16 %v854, %v854
      %v887 = vpack.c.bf16 %v855, %v855
      %v888 = vpack.c.bf16 %v856, %v856
      %v889 = vpack.c.bf16 %v857, %v857
      %v890 = vpack.c.bf16 %v858, %v858
      %v891 = vpack.c.bf16 %v859, %v859
      %vm892 = vcmask 519168
      %893 = vst.msk [vmem:[%s267] sm:$0xf] %vm892, %v860
      %894 = vst.msk [vmem:[%s267 + $0x4] sm:$0xf] %vm892, %v861
      %895 = vst.msk [vmem:[%s267 + $0x8] sm:$0xf] %vm892, %v862
      %896 = vst.msk [vmem:[%s267 + $0xc] sm:$0xf] %vm892, %v863
      %897 = vst.msk [vmem:[%s267 + $0x10] sm:$0xf] %vm892, %v864
      %898 = vst.msk [vmem:[%s267 + $0x14] sm:$0xf] %vm892, %v865
      %899 = vst.msk [vmem:[%s267 + $0x18] sm:$0xf] %vm892, %v866
      %900 = vst.msk [vmem:[%s267 + $0x1c] sm:$0xf] %vm892, %v867
      %901 = vst.msk [vmem:[%s267 + $0x20] sm:$0xf] %vm892, %v868
      %902 = vst.msk [vmem:[%s267 + $0x24] sm:$0xf] %vm892, %v869
      %903 = vst.msk [vmem:[%s267 + $0x28] sm:$0xf] %vm892, %v870
      %904 = vst.msk [vmem:[%s267 + $0x2c] sm:$0xf] %vm892, %v871
      %905 = vst.msk [vmem:[%s267 + $0x30] sm:$0xf] %vm892, %v872
      %906 = vst.msk [vmem:[%s267 + $0x34] sm:$0xf] %vm892, %v873
      %907 = vst.msk [vmem:[%s267 + $0x38] sm:$0xf] %vm892, %v874
      %908 = vst.msk [vmem:[%s267 + $0x3c] sm:$0xf] %vm892, %v875
      %909 = vst.msk [vmem:[%s267 + $0x40] sm:$0xf] %vm892, %v876
      %910 = vst.msk [vmem:[%s267 + $0x44] sm:$0xf] %vm892, %v877
      %911 = vst.msk [vmem:[%s267 + $0x48] sm:$0xf] %vm892, %v878
      %912 = vst.msk [vmem:[%s267 + $0x4c] sm:$0xf] %vm892, %v879
      %913 = vst.msk [vmem:[%s267 + $0x50] sm:$0xf] %vm892, %v880
      %914 = vst.msk [vmem:[%s267 + $0x54] sm:$0xf] %vm892, %v881
      %915 = vst.msk [vmem:[%s267 + $0x58] sm:$0xf] %vm892, %v882
      %916 = vst.msk [vmem:[%s267 + $0x5c] sm:$0xf] %vm892, %v883
      %917 = vst.msk [vmem:[%s267 + $0x60] sm:$0xf] %vm892, %v884
      %918 = vst.msk [vmem:[%s267 + $0x64] sm:$0xf] %vm892, %v885
      %919 = vst.msk [vmem:[%s267 + $0x68] sm:$0xf] %vm892, %v886
      %920 = vst.msk [vmem:[%s267 + $0x6c] sm:$0xf] %vm892, %v887
      %921 = vst.msk [vmem:[%s267 + $0x70] sm:$0xf] %vm892, %v888
      %922 = vst.msk [vmem:[%s267 + $0x74] sm:$0xf] %vm892, %v889
      %923 = vst.msk [vmem:[%s267 + $0x78] sm:$0xf] %vm892, %v890
      %924 = vst.msk [vmem:[%s267 + $0x7c] sm:$0xf] %vm892, %v891
      %s925 = smul.u32 32, %s19
      %p926 = scmp.lt.s32.totalorder %s925, 255
      %s927 = scalar_select %p926, %s925, 255
      %p928 = scmp.lt.s32.totalorder %s20, 0
      %s929 = scalar_select %p928, %s20, 0
      %s930 = sadd.s32 %s929, %s927
      %s931 = smul.addr %s930, 4
      %s932 = scalar_lea.vmem %s4, %s931
      // Predicated region
      $region37: #{tpu_custom_call.1} parent=35 // pred_check
        %p933 = pneg %p151
      $region38: #{tpu_custom_call.1} parent=35 // pred_check_branch
        %935 = sbr.rel (%p933) target = $region40
      $region39: #{tpu_custom_call.1} parent=35 // pred_region
        %s936 = smul.u32 32, %s19
      $region40: #{tpu_custom_call.1} parent=35 // pred_fallthru
        _
    $region36: #{tpu_custom_call.1} parent=5 // pred_fallthru
      _
    %p937 = scmp.le.s32.totalorder 2, %s10
    // Predicated region
    $region41: #{tpu_custom_call.1} parent=5 // pred_check
      %p938 = pneg %p937
    $region42: #{tpu_custom_call.1} parent=5 // pred_check_branch
      %940 = sbr.rel (%p938) target = $region44
    $region43: #{tpu_custom_call.1} parent=5 // pred_region
      %s941 = ssub.s32 %s10, 2
      // Predicated region
      $region45: #{tpu_custom_call.1} parent=43 // pred_check
        %p942 = pneg %p157
      $region46: #{tpu_custom_call.1} parent=43 // pred_check_branch
        %944 = sbr.rel (%p942) target = $region48
      $region47: #{tpu_custom_call.1} parent=43 // pred_region
        %s945 = smul.u32 32, %s21
        %p946 = scmp.lt.s32.totalorder %s945, 255
        %s947 = scalar_select %p946, %s945, 255
        %p948 = scmp.lt.s32.totalorder %s22, 0
        %s949 = scalar_select %p948, %s22, 0
        %s950 = sadd.s32 %s949, %s947
        %s951 = smul.addr %s950, 4
        %s952 = scalar_lea.vmem %s4, %s951
      $region48: #{tpu_custom_call.1} parent=43 // pred_fallthru
        _
    $region44: #{tpu_custom_call.1} parent=5 // pred_fallthru
      _
  $region6: #{tpu_custom_call.1} parent=0 // loop_footer
    %s14 = sadd.s32 1, %s10
  $region7: #{tpu_custom_call.1} parent=0 // loop_footer_branch
    %9 = sbr.rel target = $region3
  $region8: #{tpu_custom_call.1} parent=0 // loop_exit
    _

</llo_original>
